<compile_context>
chip_gen: v7x
topology: tpu7x:2x2x1
jax: 0.10.0
libtpu: 0.0.40
codegen_flags: <defaults>
</compile_context>

<pallas_src>
import functools

import numpy as np
import jax
import jax.numpy as jnp
from jax import lax
from jax.experimental import pallas as pl
from jax.experimental.pallas import tpu as pltpu


def round_up(x, m):
    return (x + m - 1) // m * m


# ----------------------------------------------------------------------------
# Pallas kernel 1a: tiled GEMM with folded BN(+ReLU) pre-activation
#   o = relu?(a * scale + shift) @ w + out_bias       (affine in f32, MXU bf16)
# ----------------------------------------------------------------------------
def _mm_affine_kernel(pre_relu, a_ref, s_ref, b_ref, w_ref, bo_ref, o_ref, acc_ref):
    k = pl.program_id(2)

    @pl.when(k == 0)
    def _():
        acc_ref[...] = jnp.zeros_like(acc_ref)

    a = a_ref[...] * s_ref[...] + b_ref[...]          # f32 affine (v5e-safe)
    if pre_relu:
        a = jnp.maximum(a, 0.0)
    acc_ref[...] += jnp.dot(a.astype(jnp.bfloat16), w_ref[...],
                            preferred_element_type=jnp.float32)

    @pl.when(k == pl.num_programs(2) - 1)
    def _():
        o_ref[...] = (acc_ref[...] + bo_ref[...]).astype(o_ref.dtype)


# ----------------------------------------------------------------------------
# Pallas kernel 1b: plain tiled GEMM (bf16 operands, no VPU affine)
# ----------------------------------------------------------------------------
def _mm_plain_kernel(a_ref, w_ref, bo_ref, o_ref, acc_ref):
    k = pl.program_id(2)

    @pl.when(k == 0)
    def _():
        acc_ref[...] = jnp.zeros_like(acc_ref)

    acc_ref[...] += jnp.dot(a_ref[...], w_ref[...],
                            preferred_element_type=jnp.float32)

    @pl.when(k == pl.num_programs(2) - 1)
    def _():
        o_ref[...] = (acc_ref[...] + bo_ref[...]).astype(o_ref.dtype)


def _pick_tk(Kp):
    for cand in (512, 384, 256, 128):
        if Kp % cand == 0:
            return cand
    return 128


@functools.partial(jax.jit, static_argnames=("pre_relu",))
def pallas_matmul(a, w, scale=None, shift=None, out_bias=None, pre_relu=False):
    a = jnp.asarray(a, jnp.float32)
    w = jnp.asarray(w, jnp.float32)
    M, K = a.shape
    _, N = w.shape
    affine = scale is not None
    if out_bias is None:
        out_bias = jnp.zeros((N,), jnp.float32)

    Kp = round_up(K, 128)
    tk = _pick_tk(Kp)
    tn = 128
    Np = round_up(N, tn)
    Mp16 = round_up(M, 16)               # 16: bf16 sublane-pack friendly
    if Mp16 <= 512 and Mp16 % 128 != 0:
        Mp, tm = Mp16, Mp16
    else:
        Mp, tm = round_up(M, 128), 128

    w_p = jnp.zeros((Kp, Np), jnp.float32).at[:K, :N].set(w).astype(jnp.bfloat16)
    bo_p = jnp.zeros((1, Np), jnp.float32).at[0, :N].set(
        jnp.asarray(out_bias, jnp.float32))

    grid = (Mp // tm, Np // tn, Kp // tk)
    out_shape = jax.ShapeDtypeStruct((Mp, Np), jnp.float32)
    out_spec = pl.BlockSpec((tm, tn), lambda i, j, k: (i, j))
    scratch = [pltpu.VMEM((tm, tn), jnp.float32)]
    cparams = pltpu.CompilerParams(
        dimension_semantics=("parallel", "parallel", "arbitrary"))

    if affine:
        # padded K columns: scale=shift=0 and a=0 -> relu(0)=0 -> no contribution
        a_p = jnp.zeros((Mp, Kp), jnp.float32).at[:M, :K].set(a)
        s_p = jnp.zeros((1, Kp), jnp.float32).at[0, :K].set(
            jnp.asarray(scale, jnp.float32))
        b_p = jnp.zeros((1, Kp), jnp.float32).at[0, :K].set(
            jnp.asarray(shift, jnp.float32))
        out = pl.pallas_call(
            functools.partial(_mm_affine_kernel, pre_relu),
            out_shape=out_shape,
            grid_spec=pltpu.PrefetchScalarGridSpec(
                num_scalar_prefetch=0,
                grid=grid,
                in_specs=[
                    pl.BlockSpec((tm, tk), lambda i, j, k: (i, k)),
                    pl.BlockSpec((1, tk), lambda i, j, k: (0, k)),
                    pl.BlockSpec((1, tk), lambda i, j, k: (0, k)),
                    pl.BlockSpec((tk, tn), lambda i, j, k: (k, j)),
                    pl.BlockSpec((1, tn), lambda i, j, k: (0, j)),
                ],
                out_specs=out_spec,
                scratch_shapes=scratch),
            compiler_params=cparams,
        )(a_p, s_p, b_p, w_p, bo_p)
    else:
        a_p = jnp.zeros((Mp, Kp), jnp.float32).at[:M, :K].set(a)
        if pre_relu:                       # (unused in this model; kept for API)
            a_p = jnp.maximum(a_p, 0.0)
        a_p = a_p.astype(jnp.bfloat16)     # halve A DMA bytes
        out = pl.pallas_call(
            _mm_plain_kernel,
            out_shape=out_shape,
            grid_spec=pltpu.PrefetchScalarGridSpec(
                num_scalar_prefetch=0,
                grid=grid,
                in_specs=[
                    pl.BlockSpec((tm, tk), lambda i, j, k: (i, k)),
                    pl.BlockSpec((tk, tn), lambda i, j, k: (k, j)),
                    pl.BlockSpec((1, tn), lambda i, j, k: (0, j)),
                ],
                out_specs=out_spec,
                scratch_shapes=scratch),
            compiler_params=cparams,
        )(a_p, w_p, bo_p)
    return out[:M, :N]


# ----------------------------------------------------------------------------
# Pallas kernel 2: stand-alone BatchNorm(eval) + ReLU   (x: (R, C))
# ----------------------------------------------------------------------------
def _bn_relu_kernel(x_ref, s_ref, b_ref, o_ref):
    o_ref[...] = jnp.maximum(x_ref[...] * s_ref[...] + b_ref[...], 0.0)


@jax.jit
def pallas_bn_relu(x, scale, shift):
    x = jnp.asarray(x, jnp.float32)
    R, C = x.shape
    Cp = round_up(C, 128)
    R8 = round_up(R, 8)
    tr = min(512, R8)                      # always tile rows (v7x VMEM-safe)
    Rp = round_up(R8, tr)
    xp = jnp.zeros((Rp, Cp), jnp.float32).at[:R, :C].set(x)
    sp = jnp.zeros((1, Cp), jnp.float32).at[0, :C].set(jnp.asarray(scale, jnp.float32))
    bp = jnp.zeros((1, Cp), jnp.float32).at[0, :C].set(jnp.asarray(shift, jnp.float32))
    out = pl.pallas_call(
        _bn_relu_kernel,
        out_shape=jax.ShapeDtypeStruct((Rp, Cp), jnp.float32),
        grid_spec=pltpu.PrefetchScalarGridSpec(
            num_scalar_prefetch=0,
            grid=(Rp // tr,),
            in_specs=[
                pl.BlockSpec((tr, Cp), lambda i: (i, 0)),
                pl.BlockSpec((1, Cp), lambda i: (0, 0)),
                pl.BlockSpec((1, Cp), lambda i: (0, 0)),
            ],
            out_specs=pl.BlockSpec((tr, Cp), lambda i: (i, 0)),
        ),
        compiler_params=pltpu.CompilerParams(dimension_semantics=("parallel",)),
    )(xp, sp, bp)
    return out[:R, :C]


# ----------------------------------------------------------------------------
# Pallas kernel 3: channel-softmax attention reduction
#   out = act(scale * sum_c(feats * softmax_c(logits)) + shift)
#   logits / feats laid out as (C, P) with P = N*H*W on the lane axis.
# ----------------------------------------------------------------------------
def _attend_kernel(act, ss_ref, l_ref, f_ref, o_ref):
    l = l_ref[...]
    m = jnp.max(l, axis=0, keepdims=True)
    e = jnp.exp(l - m)
    p = e * pl.reciprocal(jnp.sum(e, axis=0, keepdims=True), approx=True)
    s = jnp.sum(f_ref[...] * p, axis=0, keepdims=True)
    s = s * ss_ref[0] + ss_ref[1]
    if act == "relu":
        s = jnp.maximum(s, 0.0)
    elif act == "sigmoid":
        s = 1.0 / (1.0 + jnp.exp(-s))      # exact: keeps output strictly in [0,1]
    o_ref[...] = s


@functools.partial(jax.jit, static_argnames=("act",))
def pallas_attend(logits, feats, scale_shift, act=None):
    logits = jnp.asarray(logits, jnp.float32)
    feats = jnp.asarray(feats, jnp.float32)
    C, P = logits.shape
    tp = min(round_up(P, 512), 8192)       # one (or few) big lane-dense tile(s)
    Pp = round_up(P, tp)
    lp = jnp.zeros((C, Pp), jnp.float32).at[:, :P].set(logits)
    fp = jnp.zeros((C, Pp), jnp.float32).at[:, :P].set(feats)
    ss = jnp.asarray(scale_shift, jnp.float32)
    out = pl.pallas_call(
        functools.partial(_attend_kernel, act),
        out_shape=jax.ShapeDtypeStruct((1, Pp), jnp.float32),
        grid_spec=pltpu.PrefetchScalarGridSpec(
            num_scalar_prefetch=0,
            grid=(Pp // tp,),
            in_specs=[
                pl.BlockSpec(memory_space=pltpu.MemorySpace.SMEM),
                pl.BlockSpec((C, tp), lambda i: (0, i)),
                pl.BlockSpec((C, tp), lambda i: (0, i)),
            ],
            out_specs=pl.BlockSpec((1, tp), lambda i: (0, i)),
        ),
        compiler_params=pltpu.CompilerParams(dimension_semantics=("parallel",)),
    )(ss, lp, fp)
    return out[0, :P]


# ----------------------------------------------------------------------------
# Convolution = im2col (JAX glue) + Pallas GEMM.
# Optional folded BN+ReLU pre-activation: spatial padding uses -shift/scale so
# padded pixels map to exactly 0 after the affine+ReLU (matches PyTorch's
# "BN+ReLU first, then zero-pad" ordering).  scale is gamma/sqrt(var+eps) and
# is never zero for the parameters generated here.
# ----------------------------------------------------------------------------
@functools.partial(jax.jit, static_argnames=("stride", "padding", "pre_relu"))
def conv2d(x, w, b=None, stride=1, padding=0, scale=None, shift=None,
           pre_relu=False):
    x = jnp.asarray(x, jnp.float32)
    w = jnp.asarray(w, jnp.float32)
    N, H, W_, Cin = x.shape
    KH, KW, _, Cout = w.shape
    if padding > 0:
        if scale is not None:
            pad_val = (-jnp.asarray(shift, jnp.float32)
                       / jnp.asarray(scale, jnp.float32))
            xp = jnp.broadcast_to(pad_val,
                                  (N, H + 2 * padding, W_ + 2 * padding, Cin))
            xp = lax.dynamic_update_slice(xp, x, (0, padding, padding, 0))
        else:
            xp = jnp.pad(x, ((0, 0), (padding, padding), (padding, padding), (0, 0)))
    else:
        xp = x
    Ho = (H + 2 * padding - KH) // stride + 1
    Wo = (W_ + 2 * padding - KW) // stride + 1
    cols = []
    for dy in range(KH):
        for dx in range(KW):
            cols.append(lax.slice(
                xp,
                (0, dy, dx, 0),
                (N, dy + (Ho - 1) * stride + 1, dx + (Wo - 1) * stride + 1, Cin),
                (1, stride, stride, 1)))
    patches = jnp.stack(cols, axis=3)                  # (N,Ho,Wo,KH*KW,Cin)
    A = patches.reshape(N * Ho * Wo, KH * KW * Cin)
    scale_k = None if scale is None else jnp.tile(jnp.asarray(scale, jnp.float32), KH * KW)
    shift_k = None if shift is None else jnp.tile(jnp.asarray(shift, jnp.float32), KH * KW)
    y = pallas_matmul(A, w.reshape(KH * KW * Cin, Cout),
                      scale=scale_k, shift=shift_k, out_bias=b, pre_relu=pre_relu)
    return y.reshape(N, Ho, Wo, Cout)


# ----------------------------------------------------------------------------
# Misc glue (pure JAX): bilinear upsample (PyTorch align_corners=False)
# ----------------------------------------------------------------------------
def bilinear_resize(x, OH, OW):
    N, h, w, C = x.shape

    def idx(out_len, in_len):
        scale = in_len / out_len
        src = (jnp.arange(out_len, dtype=jnp.float32) + 0.5) * scale - 0.5
        src = jnp.maximum(src, 0.0)
        i0 = jnp.minimum(jnp.floor(src).astype(jnp.int32), in_len - 1)
        i1 = jnp.minimum(i0 + 1, in_len - 1)
        frac = src - i0.astype(jnp.float32)
        return i0, i1, frac

    y0, y1, fy = idx(OH, h)
    x0, x1, fx = idx(OW, w)
    top = jnp.take(x, y0, axis=1)
    bot = jnp.take(x, y1, axis=1)
    rows = top * (1 - fy)[None, :, None, None] + bot * fy[None, :, None, None]
    left = jnp.take(rows, x0, axis=2)
    right = jnp.take(rows, x1, axis=2)
    return left * (1 - fx)[None, None, :, None] + right * fx[None, None, :, None]


def bn_fold(p, eps=1e-5):
    scale = p["gamma"] / np.sqrt(p["var"] + eps)
    shift = p["beta"] - p["mean"] * scale
    return scale.astype(np.float32), shift.astype(np.float32)


# ----------------------------------------------------------------------------
# Deterministic parameter initialization (DenseNet121 backbone + BANet heads)
# ----------------------------------------------------------------------------
class ParamGen:
    def __init__(self, seed=0):
        self.rng = np.random.default_rng(seed)

    def conv(self, kh, kw, cin, cout, bias=False):
        fan_in = kh * kw * cin
        w = self.rng.normal(0.0, 1.0 / np.sqrt(fan_in),
                            size=(kh, kw, cin, cout)).astype(np.float32)
        b = (self.rng.normal(0.0, 0.01, size=(cout,)).astype(np.float32)
             if bias else None)
        return w, b

    def bn(self, c):
        return dict(
            gamma=self.rng.uniform(0.5, 1.5, c).astype(np.float32),
            beta=self.rng.normal(0.0, 0.1, c).astype(np.float32),
            mean=self.rng.normal(0.0, 0.1, c).astype(np.float32),
            var=self.rng.uniform(0.5, 1.5, c).astype(np.float32),
        )

    def linear(self, fin, fout):
        w = self.rng.normal(0.0, 1.0 / np.sqrt(fin),
                            size=(fin, fout)).astype(np.float32)
        b = self.rng.normal(0.0, 0.01, size=(fout,)).astype(np.float32)
        return w, b


def init_params(image_size):
    g = ParamGen(0)
    P = {}
    P["conv0_w"], _ = g.conv(7, 7, 3, 64)
    P["norm0"] = g.bn(64)

    def dense_block(num_layers, cin):
        layers, c = [], cin
        for _ in range(num_layers):
            lp = {
                "norm1": g.bn(c),
                "conv1_w": g.conv(1, 1, c, 128)[0],
                "norm2": g.bn(128),
                "conv2_w": g.conv(3, 3, 128, 32)[0],
            }
            layers.append(lp)
            c += 32
        return layers, c

    P["block1"], c = dense_block(6, 64)              # -> 256
    P["trans1"] = {"norm": g.bn(c), "conv_w": g.conv(1, 1, c, c // 2)[0]}; c //= 2
    P["block2"], c = dense_block(12, c)              # -> 512
    P["trans2"] = {"norm": g.bn(c), "conv_w": g.conv(1, 1, c, c // 2)[0]}; c //= 2
    P["block3"], c = dense_block(24, c)              # -> 1024
    P["trans3"] = {"norm": g.bn(c), "conv_w": g.conv(1, 1, c, c // 2)[0]}; c //= 2
    P["block4"], c = dense_block(16, c)              # -> 1024

    fc_ch = (image_size[0] // 32) * (image_size[1] // 32)

    def d2s_params(cin, bs, truncated=False):
        d = {
            "bn": g.bn(cin),
            "proj_w": g.conv(1, 1, cin, bs * bs)[0],
        }
        d["fc_w"], d["fc_b"] = g.linear(fc_ch, fc_ch)
        d["conv_w"], d["conv_b"] = g.conv(3, 3, 2, 2, bias=True)
        if not truncated:
            d["bn_out"] = g.bn(1)
        return d

    chans = [64, 128, 256, 512, 1024]
    bss = [4, 8, 16, 32, 32]
    P["d2s_F"] = [d2s_params(c_, b_) for c_, b_ in zip(chans, bss)]
    P["d2s_B"] = [d2s_params(c_, b_) for c_, b_ in zip(chans, bss)]
    P["d2s_Feat"] = [d2s_params(c_, b_, truncated=True) for c_, b_ in zip(chans, bss)]

    conv9_F = [g.conv(9, 9, i + 1, 1, bias=True) for i in range(5)]
    conv9_B = [g.conv(9, 9, 5 - i, 1, bias=True) for i in range(5)]
    conv3_F = g.conv(3, 3, 5, 5, bias=True)
    conv3_B = g.conv(3, 3, 5, 5, bias=True)
    P["conv3x3_A_bn"] = g.bn(10)
    P["conv3x3_A"] = g.conv(3, 3, 10, 5, bias=True)

    # --- pack the tiny-Cout head convs into block-structured weights ---
    # Each packed output channel only "sees" the channels its original conv
    # consumed (others are zero), so per-branch connectivity is preserved.
    def pack9(convs, forward):
        Wp = np.zeros((9, 9, 5, 5), np.float32)
        bp = np.zeros((5,), np.float32)
        for i, (w, b) in enumerate(convs):
            if forward:
                Wp[:, :, :i + 1, i] = w[:, :, :, 0]     # F_i sees d2s_F[0..i]
            else:
                Wp[:, :, i:, i] = w[:, :, :, 0]         # B_i sees d2s_B[i..4]
            bp[i] = b[0]
        return Wp, bp

    P["conv9x9_F_packed"] = pack9(conv9_F, True)
    P["conv9x9_B_packed"] = pack9(conv9_B, False)

    W3 = np.zeros((3, 3, 10, 10), np.float32)
    W3[:, :, :5, :5] = conv3_F[0]
    W3[:, :, 5:, 5:] = conv3_B[0]
    b3 = np.concatenate([conv3_F[1], conv3_B[1]]).astype(np.float32)
    P["conv3x3_FB_packed"] = (W3, b3)
    return P


# ----------------------------------------------------------------------------
# Model pieces
# ----------------------------------------------------------------------------
def dense_layer(x, lp):
    N, H, W_, C = x.shape
    s1, b1 = bn_fold(lp["norm1"])
    y = pallas_matmul(x.reshape(-1, C), lp["conv1_w"].reshape(C, 128),
                      scale=s1, shift=b1, pre_relu=True)      # norm1+relu folded
    y = y.reshape(N, H, W_, 128)
    s2, b2 = bn_fold(lp["norm2"])
    # norm2+relu folded into the 3x3-conv GEMM (no standalone BN kernel)
    new = conv2d(y, lp["conv2_w"], padding=1, scale=s2, shift=b2, pre_relu=True)
    return jnp.concatenate([x, new], axis=-1)


def transition(x, tp):
    N, H, W_, C = x.shape
    s, b = bn_fold(tp["norm"])
    cw = tp["conv_w"]
    y = pallas_matmul(x.reshape(-1, C), cw.reshape(C, cw.shape[-1]),
                      scale=s, shift=b, pre_relu=True)
    Cout = cw.shape[-1]
    y = y.reshape(N, H, W_, Cout)
    return y.reshape(N, H // 2, 2, W_ // 2, 2, Cout).mean(axis=(2, 4))


def d2s_block(x, dp, image_size, bs, truncated):
    N, H, W_, C = x.shape
    IH, IW = image_size
    s, b = bn_fold(dp["bn"])
    init = pallas_matmul(x.reshape(-1, C), dp["proj_w"].reshape(C, bs * bs),
                         scale=s, shift=b, pre_relu=True)
    init = init.reshape(N, H, W_, bs, bs)
    d2s = init.transpose(0, 1, 3, 2, 4).reshape(N, H * bs, W_ * bs, 1)  # (N,IH,IW,1)
    ap = d2s.reshape(N, IH // 32, 32, IW // 32, 32, 1).mean(axis=(2, 4))
    fc_in = ap.reshape(N, -1)
    fc = pallas_matmul(fc_in, dp["fc_w"], out_bias=dp["fc_b"])
    fc = jnp.maximum(fc, 0.0)                           # tiny glue ReLU
    fc = fc.reshape(N, IH // 32, IW // 32, 1)
    up = bilinear_resize(fc, IH, IW)
    concat = jnp.concatenate([d2s, up], axis=-1)        # (N,IH,IW,2)
    logits = conv2d(concat, dp["conv_w"], b=dp["conv_b"], padding=1)
    lcp = logits.transpose(3, 0, 1, 2).reshape(2, -1)
    fcp = concat.transpose(3, 0, 1, 2).reshape(2, -1)
    if truncated:
        out = pallas_attend(lcp, fcp, np.array([1.0, 0.0], np.float32), act=None)
    else:
        so, bo = bn_fold(dp["bn_out"])
        out = pallas_attend(lcp, fcp,
                            np.array([so[0], bo[0]], np.float32), act="relu")
    return out.reshape(N, IH, IW, 1)


def banet_forward(x_nchw, P, image_size):
    IH, IW = image_size
    x = jnp.transpose(jnp.asarray(x_nchw, jnp.float32), (0, 2, 3, 1))  # NCHW->NHWC

    # ---- S1: conv0 / norm0 / relu0 / pool0 ----
    y = conv2d(x, P["conv0_w"], stride=2, padding=3)
    N, H, W_, C = y.shape
    s, b = bn_fold(P["norm0"])
    y = pallas_bn_relu(y.reshape(-1, C), s, b).reshape(N, H, W_, C)
    s1 = lax.reduce_window(y, -jnp.inf, lax.max, (1, 3, 3, 1), (1, 2, 2, 1),
                           ((0, 0), (1, 1), (1, 1), (0, 0)))

    def run_block(z, layers):
        for lp in layers:
            z = dense_layer(z, lp)
        return z

    s2 = transition(run_block(s1, P["block1"]), P["trans1"])
    s3 = transition(run_block(s2, P["block2"]), P["trans2"])
    s4 = transition(run_block(s3, P["block3"]), P["trans3"])
    s5 = run_block(s4, P["block4"])

    feats = [s1, s2, s3, s4, s5]
    bss = [4, 8, 16, 32, 32]
    # TODO(synk): the F/B/Feat projections of the same stage could be batched
    #             into one GEMM call to feed both v7x TensorCores better.
    d2s_F = [d2s_block(f, p, image_size, bs, False)
             for f, p, bs in zip(feats, P["d2s_F"], bss)]
    d2s_B = [d2s_block(f, p, image_size, bs, False)
             for f, p, bs in zip(feats, P["d2s_B"], bss)]
    d2s_Feat = [d2s_block(f, p, image_size, bs, True)
                for f, p, bs in zip(feats, P["d2s_Feat"], bss)]

    # ---- packed forward / backward refinement paths (1 GEMM each) ----
    D2S_F = jnp.concatenate(d2s_F, axis=-1)                       # (N,IH,IW,5)
    w9F, b9F = P["conv9x9_F_packed"]
    conv9F = conv2d(D2S_F, w9F, b=b9F, padding=4)                 # (N,IH,IW,5)

    D2S_B = jnp.concatenate(d2s_B, axis=-1)                       # (N,IH,IW,5)
    w9B, b9B = P["conv9x9_B_packed"]
    conv9B = conv2d(D2S_B, w9B, b=b9B, padding=4)                 # (N,IH,IW,5)

    # conv3x3_F and conv3x3_B packed block-diagonally -> concat_A directly
    w3, b3 = P["conv3x3_FB_packed"]
    concat_A = conv2d(jnp.concatenate([conv9F, conv9B], axis=-1),
                      w3, b=b3, padding=1)                        # (N,IH,IW,10)

    # ---- attention head: BN(10)+ReLU folded into the 3x3 conv GEMM ----
    sA, bA = bn_fold(P["conv3x3_A_bn"])
    logits = conv2d(concat_A, P["conv3x3_A"][0], b=P["conv3x3_A"][1],
                    padding=1, scale=sA, shift=bA, pre_relu=True) # (N,IH,IW,5)
    features = jnp.concatenate(d2s_Feat, axis=-1)                 # (N,IH,IW,5)

    Nb = logits.shape[0]
    lcp = logits.transpose(3, 0, 1, 2).reshape(5, -1)
    fcp = features.transpose(3, 0, 1, 2).reshape(5, -1)
    out = pallas_attend(lcp, fcp, np.array([1.0, 0.0], np.float32), act="sigmoid")
    out = out.reshape(Nb, IH, IW, 1)
    return jnp.transpose(out, (0, 3, 1, 2))                       # back to NCHW


# ----------------------------------------------------------------------------
if __name__ == "__main__":
    # small image size consistent with the module constraints
    # (divisible by 32; DenseNet channel structure is fixed by the architecture)
    IMAGE_SIZE = (64, 64)
    key = jax.random.PRNGKey(0)
    x = jax.random.normal(key, (1, 3, IMAGE_SIZE[0], IMAGE_SIZE[1]), dtype=jnp.float32)

    params = init_params(IMAGE_SIZE)
    out = banet_forward(x, params, IMAGE_SIZE)
    out = jax.block_until_ready(out)

    assert out.shape == (1, 1, IMAGE_SIZE[0], IMAGE_SIZE[1]), out.shape
    assert bool(jnp.all(jnp.isfinite(out)))
    assert bool(jnp.all(out >= 0.0)) and bool(jnp.all(out <= 1.0))  # sigmoid output
    print("KERNEL_OK")
</pallas_src>

<mosaic_0001>
module attributes {stable_mosaic.version = 11 : i64} {
  func.func @_mm_plain_kernel(%arg0: i32, %arg1: i32, %arg2: i32, %arg3: memref<128x256xbf16, #tpu.memory_space<vmem>>, %arg4: memref<256x128xbf16, #tpu.memory_space<vmem>>, %arg5: memref<1x128xf32, #tpu.memory_space<vmem>>, %arg6: memref<128x128xf32, #tpu.memory_space<vmem>>, %arg7: memref<128x128xf32, #tpu.memory_space<vmem>>) attributes {dimension_semantics = [#tpu.dimension_semantics<parallel>, #tpu.dimension_semantics<parallel>, #tpu.dimension_semantics<arbitrary>], iteration_bounds = array<i64: 8, 1, 1>, scalar_prefetch = 0 : i64, scratch_operands = 1 : i64, tpu.core_type = #tpu.core_type<tc>, window_params = [{transform_indices = @transform_0, window_bounds = array<i64: 128, 256>}, {transform_indices = @transform_1, window_bounds = array<i64: 256, 128>}, {transform_indices = @transform_2, window_bounds = array<i64: 1, 128>}, {transform_indices = @transform_3, window_bounds = array<i64: 128, 128>}]} {
    %c0_i32 = arith.constant 0 : i32
    %0 = arith.cmpi eq, %arg2, %c0_i32 : i32
    %1 = arith.extui %0 : i1 to i32
    %c0_i32_0 = arith.constant 0 : i32
    %2 = arith.cmpi ne, %1, %c0_i32_0 : i32
    scf.if %2 {
      %cst_10 = arith.constant 0.000000e+00 : f32
      %12 = vector.broadcast %cst_10 : f32 to vector<128x128xf32>
      %c0_11 = arith.constant 0 : index
      %c0_12 = arith.constant 0 : index
      %13 = vector.load %arg7[%c0_11, %c0_12] : memref<128x128xf32, #tpu.memory_space<vmem>>, vector<128x128xf32>
      tpu.vector_store %arg7[%c0_11, %c0_12], %12 {strides = array<i32>} : memref<128x128xf32, #tpu.memory_space<vmem>>, vector<128x128xf32>,
    } else {
    }
    %c0 = arith.constant 0 : index
    %c0_1 = arith.constant 0 : index
    %3 = vector.load %arg7[%c0, %c0_1] : memref<128x128xf32, #tpu.memory_space<vmem>>, vector<128x128xf32>
    %c0_2 = arith.constant 0 : index
    %c0_3 = arith.constant 0 : index
    %4 = vector.load %arg3[%c0_2, %c0_3] : memref<128x256xbf16, #tpu.memory_space<vmem>>, vector<128x256xbf16>
    %c0_4 = arith.constant 0 : index
    %c0_5 = arith.constant 0 : index
    %5 = vector.load %arg4[%c0_4, %c0_5] : memref<256x128xbf16, #tpu.memory_space<vmem>>, vector<256x128xbf16>
    %cst = arith.constant dense<0.000000e+00> : vector<128x128xf32>
    %6 = tpu.matmul %4, %5, %cst {dimension_numbers = #tpu.dot_dimension_numbers<[1], [0], [0], [1], [0, 0, 1, 1], [], []>} : vector<128x256xbf16>, vector<256x128xbf16>, vector<128x128xf32> -> vector<128x128xf32>
    %7 = arith.addf %3, %6 : vector<128x128xf32>
    %c0_6 = arith.constant 0 : index
    %c0_7 = arith.constant 0 : index
    %8 = vector.load %arg7[%c0_6, %c0_7] : memref<128x128xf32, #tpu.memory_space<vmem>>, vector<128x128xf32>
    tpu.vector_store %arg7[%c0_6, %c0_7], %7 {strides = array<i32>} : memref<128x128xf32, #tpu.memory_space<vmem>>, vector<128x128xf32>,
    %c0_i32_8 = arith.constant 0 : i32
    %9 = arith.cmpi eq, %arg2, %c0_i32_8 : i32
    %10 = arith.extui %9 : i1 to i32
    %c0_i32_9 = arith.constant 0 : i32
    %11 = arith.cmpi ne, %10, %c0_i32_9 : i32
    scf.if %11 {
      %c0_10 = arith.constant 0 : index
      %c0_11 = arith.constant 0 : index
      %12 = vector.load %arg7[%c0_10, %c0_11] : memref<128x128xf32, #tpu.memory_space<vmem>>, vector<128x128xf32>
      %c0_12 = arith.constant 0 : index
      %c0_13 = arith.constant 0 : index
      %13 = vector.load %arg5[%c0_12, %c0_13] : memref<1x128xf32, #tpu.memory_space<vmem>>, vector<1x128xf32>
      %14 = vector.broadcast %13 : vector<1x128xf32> to vector<128x128xf32>
      %15 = arith.addf %12, %14 : vector<128x128xf32>
      %c0_14 = arith.constant 0 : index
      %c0_15 = arith.constant 0 : index
      %16 = vector.load %arg6[%c0_14, %c0_15] : memref<128x128xf32, #tpu.memory_space<vmem>>, vector<128x128xf32>
      tpu.vector_store %arg6[%c0_14, %c0_15], %15 {strides = array<i32>} : memref<128x128xf32, #tpu.memory_space<vmem>>, vector<128x128xf32>,
    } else {
    }
    return
  }
  func.func @transform_0(%arg0: i32, %arg1: i32, %arg2: i32) -> (i32, i32) {
    %c0_i32 = arith.constant 0 : i32
    return %arg0, %arg2 : i32, i32
  }
  func.func @transform_1(%arg0: i32, %arg1: i32, %arg2: i32) -> (i32, i32) {
    %c0_i32 = arith.constant 0 : i32
    return %arg2, %arg1 : i32, i32
  }
  func.func @transform_2(%arg0: i32, %arg1: i32, %arg2: i32) -> (i32, i32) {
    %c0_i32 = arith.constant 0 : i32
    %c0_i32_0 = arith.constant 0 : i32
    return %c0_i32, %arg1 : i32, i32
  }
  func.func @transform_3(%arg0: i32, %arg1: i32, %arg2: i32) -> (i32, i32) {
    %c0_i32 = arith.constant 0 : i32
    return %arg0, %arg1 : i32, i32
  }
}

</mosaic_0001>

<llo_original>
// kernel: pallas_matmul.1
$region0: #{pallas_matmul.1}
  #allocation0 [shape = 'u32[]', space=smem, size = 0x4, offset = 0x4, fixed_abs, tag = 'smem constant byte address 0x4 - core index']
  #allocation1 [shape = 'u32[144,128]{1,0:T(1,128)}', space=vmem, size = 0x12000, scoped, tag = 'internal scratch']
  #allocation2 [shape = 'f32[128,128]{1,0:T(8,128)}', space=vmem, size = 0x10000, scoped, tag = 'scratch operand']
  %s0 = inlined_call_operand.vmem [shape: bf16[1024,256], index: 0, kind: input, shape index: {}]
  %s1 = inlined_call_operand.vmem [shape: bf16[256,128], index: 1, kind: input, shape index: {}]
  %s2 = inlined_call_operand.vmem [shape: f32[1,128], index: 2, kind: input, shape index: {}]
  %s3 = inlined_call_operand.vmem [shape: f32[1024,128], index: 3, kind: output, shape index: {}]
  %s4 = sld [smem:[#allocation0]]
  $region53: #{pallas_matmul.1} parent=0
    _
  %s6 = ssub.s32 1, %s4
  %s7 = scalar_select 0, %s6, %s4
  loop: start=0, step=1, limit=10
  $region2: #{pallas_matmul.1} parent=0 // loop_pre_header
    _
  $region3: #{pallas_matmul.1} parent=0 // loop_header
    %s9 = sphi 0, %s13
    %p10 = scmp.ge.s32.totalorder %s9, 10
    %s16 = sphi 0, %s35
    %s17 = sphi 0, %s31
    %s18 = sphi 0, %s27
    %s19 = sphi 0, %s16
    %s20 = sphi 0, %s17
    %s21 = sphi 0, %s18
    %s22 = sphi 0, %s19
    %s23 = sphi 0, %s20
    %s24 = sphi 0, %s21
    %s40 = sphi 0, %s42
    %s43 = sphi 0, %s40
    %s44 = sphi 0, %s43
    %s60 = sphi 0, %s44
    %s68 = sphi 0, %s70
    %s71 = sphi 0, %s68
    %s72 = sphi 0, %s71
    %s88 = sphi 0, %s72
    %s94 = sphi 0, %s96
    %s97 = sphi 0, %s94
    %s98 = sphi 0, %s97
    %s114 = sphi 0, %s98
    %s122 = sphi 0, %s124
    %s125 = sphi 0, %s122
    %s126 = sphi 0, %s125
    %s142 = sphi 0, %s126
  $region4: #{pallas_matmul.1} parent=0 // loop_header_branch
    %12 = sbr.rel (%p10) target = $region8
  $region5: #{pallas_matmul.1} parent=0 // loop_body
    %s14 = ssub.s32 %s9, 1
    %s15 = ssub.s32 %s9, 2
    %s25 = sadd.s32 1, %s18
    %p26 = scmp.ge.s32.totalorder %s25, 1
    %s27 = scalar_select %p26, 0, %s25
    %s28 = sadd.s32 1, %s17
    %s29 = scalar_select %p26, %s28, %s17
    %p30 = scmp.ge.s32.totalorder %s29, 1
    %s31 = scalar_select %p30, 0, %s29
    %s32 = sadd.s32 1, %s16
    %s33 = scalar_select %p30, %s32, %s16
    %p34 = scmp.ge.s32.totalorder %s33, 8
    %s35 = scalar_select %p34, 0, %s33
    %s36 = ssub.s32 %s16, %s35
    %s37 = ssub.s32 %s18, %s27
    %s38 = sor.u32 %s36, %s37
    %p39 = scmp.eq.s32.totalorder %s38, 0
    %s41 = sadd.s32 %s40, 1
    %s42 = scalar_select %p39, %s40, %s41
    %p45 = pneg %p39
    %p46 = scmp.eq.s32.totalorder %s9, 7
    %p47 = por %p45, %p46
    %p48 = scmp.ne.s32.totalorder %s40, %s43
    %p49 = scmp.eq.s32.totalorder %s9, 0
    %p50 = por %p48, %p49
    %p51 = scmp.ne.s32.totalorder %s40, %s43
    %p52 = scmp.eq.s32.totalorder %s14, 7
    %p53 = por %p51, %p52
    %p54 = scmp.ne.s32.totalorder %s43, %s44
    %p55 = scmp.eq.s32.totalorder %s14, 0
    %p56 = por %p54, %p55
    %p57 = scmp.ne.s32.totalorder %s43, %s44
    %p58 = scmp.eq.s32.totalorder %s15, 7
    %p59 = por %p57, %p58
    %p61 = scmp.ne.s32.totalorder %s44, %s60
    %p62 = scmp.eq.s32.totalorder %s15, 0
    %p63 = por %p61, %p62
    %s64 = ssub.s32 %s18, %s27
    %s65 = ssub.s32 %s17, %s31
    %s66 = sor.u32 %s64, %s65
    %p67 = scmp.eq.s32.totalorder %s66, 0
    %s69 = sadd.s32 %s68, 1
    %s70 = scalar_select %p67, %s68, %s69
    %p73 = pneg %p67
    %p74 = scmp.eq.s32.totalorder %s9, 7
    %p75 = por %p73, %p74
    %p76 = scmp.ne.s32.totalorder %s68, %s71
    %p77 = scmp.eq.s32.totalorder %s9, 0
    %p78 = por %p76, %p77
    %p79 = scmp.ne.s32.totalorder %s68, %s71
    %p80 = scmp.eq.s32.totalorder %s14, 7
    %p81 = por %p79, %p80
    %p82 = scmp.ne.s32.totalorder %s71, %s72
    %p83 = scmp.eq.s32.totalorder %s14, 0
    %p84 = por %p82, %p83
    %p85 = scmp.ne.s32.totalorder %s71, %s72
    %p86 = scmp.eq.s32.totalorder %s15, 7
    %p87 = por %p85, %p86
    %p89 = scmp.ne.s32.totalorder %s72, %s88
    %p90 = scmp.eq.s32.totalorder %s15, 0
    %p91 = por %p89, %p90
    %s92 = ssub.s32 %s17, %s31
    %p93 = scmp.eq.s32.totalorder %s92, 0
    %s95 = sadd.s32 %s94, 1
    %s96 = scalar_select %p93, %s94, %s95
    %p99 = pneg %p93
    %p100 = scmp.eq.s32.totalorder %s9, 7
    %p101 = por %p99, %p100
    %p102 = scmp.ne.s32.totalorder %s94, %s97
    %p103 = scmp.eq.s32.totalorder %s9, 0
    %p104 = por %p102, %p103
    %p105 = scmp.ne.s32.totalorder %s94, %s97
    %p106 = scmp.eq.s32.totalorder %s14, 7
    %p107 = por %p105, %p106
    %p108 = scmp.ne.s32.totalorder %s97, %s98
    %p109 = scmp.eq.s32.totalorder %s14, 0
    %p110 = por %p108, %p109
    %p111 = scmp.ne.s32.totalorder %s97, %s98
    %p112 = scmp.eq.s32.totalorder %s15, 7
    %p113 = por %p111, %p112
    %p115 = scmp.ne.s32.totalorder %s98, %s114
    %p116 = scmp.eq.s32.totalorder %s15, 0
    %p117 = por %p115, %p116
    %s118 = ssub.s32 %s16, %s35
    %s119 = ssub.s32 %s17, %s31
    %s120 = sor.u32 %s118, %s119
    %p121 = scmp.eq.s32.totalorder %s120, 0
    %s123 = sadd.s32 %s122, 1
    %s124 = scalar_select %p121, %s122, %s123
    %p127 = pneg %p121
    %p128 = scmp.eq.s32.totalorder %s9, 7
    %p129 = por %p127, %p128
    %p130 = scmp.ne.s32.totalorder %s122, %s125
    %p131 = scmp.eq.s32.totalorder %s9, 0
    %p132 = por %p130, %p131
    %p133 = scmp.ne.s32.totalorder %s122, %s125
    %p134 = scmp.eq.s32.totalorder %s14, 7
    %p135 = por %p133, %p134
    %p136 = scmp.ne.s32.totalorder %s125, %s126
    %p137 = scmp.eq.s32.totalorder %s14, 0
    %p138 = por %p136, %p137
    %p139 = scmp.ne.s32.totalorder %s125, %s126
    %p140 = scmp.eq.s32.totalorder %s15, 7
    %p141 = por %p139, %p140
    %p143 = scmp.ne.s32.totalorder %s126, %s142
    %p144 = scmp.eq.s32.totalorder %s15, 0
    %p145 = por %p143, %p144
    %p146 = scmp.le.s32.totalorder 1, %s9
    %p147 = scmp.lt.s32.totalorder %s9, 9
    %p148 = pnand %p146, %p147
    %p149 = pneg %p148
    // Predicated region
    $region9: #{pallas_matmul.1} parent=5 // pred_check
      _
    $region10: #{pallas_matmul.1} parent=5 // pred_check_branch
      %151 = sbr.rel (%p148) target = $region12
    $region11: #{pallas_matmul.1} parent=5 // pred_region
      %s152 = ssub.s32 %s9, 1
      // Predicated region
      $region13: #{pallas_matmul.1} parent=11 // pred_check
        %p153 = pneg %p84
      $region14: #{pallas_matmul.1} parent=11 // pred_check_branch
        %155 = sbr.rel (%p153) target = $region16
      $region15: #{pallas_matmul.1} parent=11 // pred_region
        %s156 = smul.u32 32, %s21
        %p157 = scmp.lt.s32.totalorder %s156, 31
        %s158 = scalar_select %p157, %s156, 31
        %p159 = scmp.lt.s32.totalorder %s20, 0
        %s160 = scalar_select %p159, %s20, 0
        %s161 = sadd.s32 %s160, %s158
        %s162 = smul.addr %s161, 4
        %s163 = scalar_lea.vmem %s1, %s162
        %s164 = smul.u32 32, %s21
      $region16: #{pallas_matmul.1} parent=11 // pred_fallthru
        _
      // Predicated region
      $region17: #{pallas_matmul.1} parent=11 // pred_check
        %p165 = pneg %p110
      $region18: #{pallas_matmul.1} parent=11 // pred_check_branch
        %167 = sbr.rel (%p165) target = $region20
      $region19: #{pallas_matmul.1} parent=11 // pred_region
        %p168 = scmp.lt.s32.totalorder %s20, 0
        %s169 = scalar_select %p168, %s20, 0
        %s170 = scalar_lea.vmem %s2, %s169
      $region20: #{pallas_matmul.1} parent=11 // pred_fallthru
        _
    $region12: #{pallas_matmul.1} parent=5 // pred_fallthru
      _
    %p171 = scmp.lt.s32.totalorder %s9, 8
    // Predicated region
    $region21: #{pallas_matmul.1} parent=5 // pred_check
      %p172 = pneg %p171
    $region22: #{pallas_matmul.1} parent=5 // pred_check_branch
      %174 = sbr.rel (%p172) target = $region24
    $region23: #{pallas_matmul.1} parent=5 // pred_region
      // Predicated region
      $region25: #{pallas_matmul.1} parent=23 // pred_check
        %p175 = pneg %p50
      $region26: #{pallas_matmul.1} parent=23 // pred_check_branch
        %177 = sbr.rel (%p175) target = $region28
      $region27: #{pallas_matmul.1} parent=23 // pred_region
        %s178 = smul.u32 16, %s16
        %s179 = smul.u32 2, %s18
        %p180 = scmp.lt.s32.totalorder %s178, 127
        %s181 = scalar_select %p180, %s178, 127
        %p182 = scmp.lt.s32.totalorder %s179, 1
        %s183 = scalar_select %p182, %s179, 1
        %s184 = smul.addr %s181, 2
        %s185 = sadd.s32 %s183, %s184
        %s186 = smul.addr %s185, 4
        %s187 = scalar_lea.vmem %s0, %s186
        %s188 = smul.u32 16, %s16
        %s189 = smul.u32 2, %s18
      $region28: #{pallas_matmul.1} parent=23 // pred_fallthru
        _
    $region24: #{pallas_matmul.1} parent=5 // pred_fallthru
      _
    %p190 = scmp.le.s32.totalorder 1, %s9
    %p191 = scmp.lt.s32.totalorder %s9, 9
    %p192 = pnand %p190, %p191
    %p193 = pneg %p192
    // Predicated region
    $region29: #{pallas_matmul.1} parent=5 // pred_check
      _
    $region30: #{pallas_matmul.1} parent=5 // pred_check_branch
      %195 = sbr.rel (%p192) target = $region32
    $region31: #{pallas_matmul.1} parent=5 // pred_region
      %s196 = ssub.s32 %s9, 1
      %s197 = smul.u32 16, %s19
      %s198 = smul.u32 2, %s21
      %p199 = scmp.lt.s32.totalorder %s197, 127
      %s200 = scalar_select %p199, %s197, 127
      %p201 = scmp.lt.s32.totalorder %s198, 1
      %s202 = scalar_select %p201, %s198, 1
      %s203 = smul.addr %s200, 2
      %s204 = sadd.s32 %s202, %s203
      %s205 = smul.addr %s204, 4
      %s206 = scalar_lea.vmem %s0, %s205
      %p207 = pneg %p56
      %p208 = pneg %p53
      %s209 = smul.u32 32, %s21
      %p210 = scmp.lt.s32.totalorder %s209, 31
      %s211 = scalar_select %p210, %s209, 31
      %p212 = scmp.lt.s32.totalorder %s20, 0
      %s213 = scalar_select %p212, %s20, 0
      %s214 = sadd.s32 %s213, %s211
      %s215 = smul.addr %s214, 4
      %s216 = scalar_lea.vmem %s1, %s215
      %p217 = pneg %p84
      %p218 = pneg %p81
      %p219 = scmp.lt.s32.totalorder %s20, 0
      %s220 = scalar_select %p219, %s20, 0
      %s221 = scalar_lea.vmem %s2, %s220
      %p222 = pneg %p110
      %p223 = pneg %p107
      %p224 = pneg %p138
      %p225 = pneg %p135
      %s226 = smul.u32 16, %s19
      %p227 = scmp.lt.s32.totalorder %s226, 127
      %s228 = scalar_select %p227, %s226, 127
      %p229 = scmp.lt.s32.totalorder %s20, 0
      %s230 = scalar_select %p229, %s20, 0
      %s231 = sadd.s32 %s230, %s228
      %s232 = smul.addr %s231, 8
      %s233 = scalar_lea.vmem %s3, %s232
      %s234 = smul.u32 16, %s19
      %s235 = smul.u32 2, %s21
      %p236 = scmp.lt.s32.totalorder %s234, 127
      %s237 = scalar_select %p236, %s234, 127
      %p238 = scmp.lt.s32.totalorder %s235, 1
      %s239 = scalar_select %p238, %s235, 1
      %s240 = smul.addr %s237, 2
      %s241 = sadd.s32 %s239, %s240
      %s242 = smul.addr %s241, 4
      %s243 = scalar_lea.vmem %s0, %s242
      %s244 = smul.u32 16, %s19
      %s245 = smul.u32 2, %s21
      %s246 = smul.u32 32, %s21
      %p247 = scmp.lt.s32.totalorder %s246, 31
      %s248 = scalar_select %p247, %s246, 31
      %p249 = scmp.lt.s32.totalorder %s20, 0
      %s250 = scalar_select %p249, %s20, 0
      %s251 = sadd.s32 %s250, %s248
      %s252 = smul.addr %s251, 4
      %s253 = scalar_lea.vmem %s1, %s252
      %s254 = smul.u32 32, %s21
      %p255 = scmp.lt.s32.totalorder %s20, 0
      %s256 = scalar_select %p255, %s20, 0
      %s257 = scalar_lea.vmem %s2, %s256
      %s258 = smul.u32 16, %s19
      %p259 = scmp.lt.s32.totalorder %s258, 127
      %s260 = scalar_select %p259, %s258, 127
      %p261 = scmp.lt.s32.totalorder %s20, 0
      %s262 = scalar_select %p261, %s20, 0
      %s263 = sadd.s32 %s262, %s260
      %s264 = smul.addr %s263, 8
      %s265 = scalar_lea.vmem %s3, %s264
      %s266 = smul.u32 16, %s19
      %p268 = scmp.eq.s32.totalorder %s21, 0
      // Predicated region
      $region33: #{pallas_matmul.1} parent=31 // pred_check
        %p269 = pneg %p268
      $region34: #{pallas_matmul.1} parent=31 // pred_check_branch
        %271 = sbr.rel (%p269) target = $region36
      $region35: #{pallas_matmul.1} parent=31 // pred_region
        %272 = vst [vmem:[#allocation2] sm:$0xff] 0.0
        %273 = vst [vmem:[#allocation2 + $0x8] sm:$0xff] 0.0
        %274 = vst [vmem:[#allocation2 + $0x10] sm:$0xff] 0.0
        %275 = vst [vmem:[#allocation2 + $0x18] sm:$0xff] 0.0
        %276 = vst [vmem:[#allocation2 + $0x20] sm:$0xff] 0.0
        %277 = vst [vmem:[#allocation2 + $0x28] sm:$0xff] 0.0
        %278 = vst [vmem:[#allocation2 + $0x30] sm:$0xff] 0.0
        %279 = vst [vmem:[#allocation2 + $0x38] sm:$0xff] 0.0
        %280 = vst [vmem:[#allocation2 + $0x40] sm:$0xff] 0.0
        %281 = vst [vmem:[#allocation2 + $0x48] sm:$0xff] 0.0
        %282 = vst [vmem:[#allocation2 + $0x50] sm:$0xff] 0.0
        %283 = vst [vmem:[#allocation2 + $0x58] sm:$0xff] 0.0
        %284 = vst [vmem:[#allocation2 + $0x60] sm:$0xff] 0.0
        %285 = vst [vmem:[#allocation2 + $0x68] sm:$0xff] 0.0
        %286 = vst [vmem:[#allocation2 + $0x70] sm:$0xff] 0.0
        %287 = vst [vmem:[#allocation2 + $0x78] sm:$0xff] 0.0
      $region36: #{pallas_matmul.1} parent=31 // pred_fallthru
        _
      %v288 = vld [vmem:[#allocation2] sm:$0xff]
      %v289 = vld [vmem:[#allocation2 + $0x8] sm:$0xff]
      %v290 = vld [vmem:[#allocation2 + $0x10] sm:$0xff]
      %v291 = vld [vmem:[#allocation2 + $0x18] sm:$0xff]
      %v292 = vld [vmem:[#allocation2 + $0x20] sm:$0xff]
      %v293 = vld [vmem:[#allocation2 + $0x28] sm:$0xff]
      %v294 = vld [vmem:[#allocation2 + $0x30] sm:$0xff]
      %v295 = vld [vmem:[#allocation2 + $0x38] sm:$0xff]
      %v296 = vld [vmem:[#allocation2 + $0x40] sm:$0xff]
      %v297 = vld [vmem:[#allocation2 + $0x48] sm:$0xff]
      %v298 = vld [vmem:[#allocation2 + $0x50] sm:$0xff]
      %v299 = vld [vmem:[#allocation2 + $0x58] sm:$0xff]
      %v300 = vld [vmem:[#allocation2 + $0x60] sm:$0xff]
      %v301 = vld [vmem:[#allocation2 + $0x68] sm:$0xff]
      %v302 = vld [vmem:[#allocation2 + $0x70] sm:$0xff]
      %v303 = vld [vmem:[#allocation2 + $0x78] sm:$0xff]
      %v304 = vld [vmem:[%s243] sm:$0xff]
      %v305 = vld [vmem:[%s243 + $0x8] sm:$0xff]
      %v306 = vld [vmem:[%s243 + $0x10] sm:$0xff]
      %v307 = vld [vmem:[%s243 + $0x18] sm:$0xff]
      %v308 = vld [vmem:[%s243 + $0x20] sm:$0xff]
      %v309 = vld [vmem:[%s243 + $0x28] sm:$0xff]
      %v310 = vld [vmem:[%s243 + $0x30] sm:$0xff]
      %v311 = vld [vmem:[%s243 + $0x38] sm:$0xff]
      %v312 = vld [vmem:[%s243 + $0x40] sm:$0xff]
      %v313 = vld [vmem:[%s243 + $0x48] sm:$0xff]
      %v314 = vld [vmem:[%s243 + $0x50] sm:$0xff]
      %v315 = vld [vmem:[%s243 + $0x58] sm:$0xff]
      %v316 = vld [vmem:[%s243 + $0x60] sm:$0xff]
      %v317 = vld [vmem:[%s243 + $0x68] sm:$0xff]
      %v318 = vld [vmem:[%s243 + $0x70] sm:$0xff]
      %v319 = vld [vmem:[%s243 + $0x78] sm:$0xff]
      %v320 = vld [vmem:[%s253] sm:$0xf]
      %v321 = vld [vmem:[%s253 + $0x4] sm:$0xf]
      %v322 = vld [vmem:[%s253 + $0x8] sm:$0xf]
      %v323 = vld [vmem:[%s253 + $0xc] sm:$0xf]
      %v324 = vld [vmem:[%s253 + $0x10] sm:$0xf]
      %v325 = vld [vmem:[%s253 + $0x14] sm:$0xf]
      %v326 = vld [vmem:[%s253 + $0x18] sm:$0xf]
      %v327 = vld [vmem:[%s253 + $0x1c] sm:$0xf]
      %v328 = vld [vmem:[%s253 + $0x20] sm:$0xf]
      %v329 = vld [vmem:[%s253 + $0x24] sm:$0xf]
      %v330 = vld [vmem:[%s253 + $0x28] sm:$0xf]
      %v331 = vld [vmem:[%s253 + $0x2c] sm:$0xf]
      %v332 = vld [vmem:[%s253 + $0x30] sm:$0xf]
      %v333 = vld [vmem:[%s253 + $0x34] sm:$0xf]
      %v334 = vld [vmem:[%s253 + $0x38] sm:$0xf]
      %v335 = vld [vmem:[%s253 + $0x3c] sm:$0xf]
      %v336 = vld [vmem:[%s253 + $0x40] sm:$0xf]
      %v337 = vld [vmem:[%s253 + $0x44] sm:$0xf]
      %v338 = vld [vmem:[%s253 + $0x48] sm:$0xf]
      %v339 = vld [vmem:[%s253 + $0x4c] sm:$0xf]
      %v340 = vld [vmem:[%s253 + $0x50] sm:$0xf]
      %v341 = vld [vmem:[%s253 + $0x54] sm:$0xf]
      %v342 = vld [vmem:[%s253 + $0x58] sm:$0xf]
      %v343 = vld [vmem:[%s253 + $0x5c] sm:$0xf]
      %v344 = vld [vmem:[%s253 + $0x60] sm:$0xf]
      %v345 = vld [vmem:[%s253 + $0x64] sm:$0xf]
      %v346 = vld [vmem:[%s253 + $0x68] sm:$0xf]
      %v347 = vld [vmem:[%s253 + $0x6c] sm:$0xf]
      %v348 = vld [vmem:[%s253 + $0x70] sm:$0xf]
      %v349 = vld [vmem:[%s253 + $0x74] sm:$0xf]
      %v350 = vld [vmem:[%s253 + $0x78] sm:$0xf]
      %v351 = vld [vmem:[%s253 + $0x7c] sm:$0xf]
      %v368 = vunpack.c.l.b16 %v304
      %v369 = vunpack.c.h.b16 %v304
      %v370 = vunpack.c.l.b16 %v305
      %v371 = vunpack.c.h.b16 %v305
      %v372 = vunpack.c.l.b16 %v306
      %v373 = vunpack.c.h.b16 %v306
      %v374 = vunpack.c.l.b16 %v307
      %v375 = vunpack.c.h.b16 %v307
      %v376 = vunpack.c.l.b16 %v308
      %v377 = vunpack.c.h.b16 %v308
      %v378 = vunpack.c.l.b16 %v309
      %v379 = vunpack.c.h.b16 %v309
      %v380 = vunpack.c.l.b16 %v310
      %v381 = vunpack.c.h.b16 %v310
      %v382 = vunpack.c.l.b16 %v311
      %v383 = vunpack.c.h.b16 %v311
      %v384 = vunpack.c.l.b16 %v312
      %v385 = vunpack.c.h.b16 %v312
      %v386 = vunpack.c.l.b16 %v313
      %v387 = vunpack.c.h.b16 %v313
      %v388 = vunpack.c.l.b16 %v314
      %v389 = vunpack.c.h.b16 %v314
      %v390 = vunpack.c.l.b16 %v315
      %v391 = vunpack.c.h.b16 %v315
      %v392 = vunpack.c.l.b16 %v316
      %v393 = vunpack.c.h.b16 %v316
      %v394 = vunpack.c.l.b16 %v317
      %v395 = vunpack.c.h.b16 %v317
      %v396 = vunpack.c.l.b16 %v318
      %v397 = vunpack.c.h.b16 %v318
      %v398 = vunpack.c.l.b16 %v319
      %v399 = vunpack.c.h.b16 %v319
      %v400 = vpack.c.b16 %v370, %v368
      %v401 = vpack.c.b16 %v371, %v369
      %v402 = vpack.c.b16 %v374, %v372
      %v403 = vpack.c.b16 %v375, %v373
      %v404 = vpack.c.b16 %v378, %v376
      %v405 = vpack.c.b16 %v379, %v377
      %v406 = vpack.c.b16 %v382, %v380
      %v407 = vpack.c.b16 %v383, %v381
      %v408 = vpack.c.b16 %v386, %v384
      %v409 = vpack.c.b16 %v387, %v385
      %v410 = vpack.c.b16 %v390, %v388
      %v411 = vpack.c.b16 %v391, %v389
      %v412 = vpack.c.b16 %v394, %v392
      %v413 = vpack.c.b16 %v395, %v393
      %v414 = vpack.c.b16 %v398, %v396
      %v415 = vpack.c.b16 %v399, %v397
      %v464 = vunpack.c.l.b16 %v320
      %v465 = vunpack.c.l.b16 %v321
      %v466 = vunpack.c.l.b16 %v322
      %v467 = vunpack.c.l.b16 %v323
      %v468 = vunpack.c.l.b16 %v324
      %v469 = vunpack.c.l.b16 %v325
      %v470 = vunpack.c.l.b16 %v326
      %v471 = vunpack.c.l.b16 %v327
      %v472 = vunpack.c.l.b16 %v328
      %v473 = vunpack.c.l.b16 %v329
      %v474 = vunpack.c.l.b16 %v330
      %v475 = vunpack.c.l.b16 %v331
      %v476 = vunpack.c.l.b16 %v332
      %v477 = vunpack.c.l.b16 %v333
      %v478 = vunpack.c.l.b16 %v334
      %v479 = vunpack.c.l.b16 %v335
      %v480 = vunpack.c.l.b16 %v336
      %v481 = vunpack.c.l.b16 %v337
      %v482 = vunpack.c.l.b16 %v338
      %v483 = vunpack.c.l.b16 %v339
      %v484 = vunpack.c.l.b16 %v340
      %v485 = vunpack.c.l.b16 %v341
      %v486 = vunpack.c.l.b16 %v342
      %v487 = vunpack.c.l.b16 %v343
      %v488 = vunpack.c.l.b16 %v344
      %v489 = vunpack.c.l.b16 %v345
      %v490 = vunpack.c.l.b16 %v346
      %v491 = vunpack.c.l.b16 %v347
      %v492 = vunpack.c.l.b16 %v348
      %v493 = vunpack.c.l.b16 %v349
      %v494 = vunpack.c.l.b16 %v350
      %v495 = vunpack.c.l.b16 %v351
      %v496 = vpack.c.b16 %v465, %v464
      %v497 = vpack.c.b16 %v467, %v466
      %v498 = vpack.c.b16 %v469, %v468
      %v499 = vpack.c.b16 %v471, %v470
      %v500 = vpack.c.b16 %v473, %v472
      %v501 = vpack.c.b16 %v475, %v474
      %v502 = vpack.c.b16 %v477, %v476
      %v503 = vpack.c.b16 %v479, %v478
      %v504 = vpack.c.b16 %v481, %v480
      %v505 = vpack.c.b16 %v483, %v482
      %v506 = vpack.c.b16 %v485, %v484
      %v507 = vpack.c.b16 %v487, %v486
      %v508 = vpack.c.b16 %v489, %v488
      %v509 = vpack.c.b16 %v491, %v490
      %v510 = vpack.c.b16 %v493, %v492
      %v511 = vpack.c.b16 %v495, %v494
      %528 = vmatprep.subr.bf16.mxu0 0
      %529 = vmatpush1.bf16.msra.mxu0 %v496
      %530 = vmatprep.subr.bf16.mxu0 0
      %531 = vmatpush1.bf16.msra.mxu0 %v497
      %532 = vmatprep.subr.bf16.mxu0 0
      %533 = vmatpush1.bf16.msra.mxu0 %v498
      %534 = vmatprep.subr.bf16.mxu0 0
      %535 = vmatpush1.bf16.msra.mxu0 %v499
      %536 = vmatprep.subr.bf16.mxu0 0
      %537 = vmatpush1.bf16.msra.mxu0 %v500
      %538 = vmatprep.subr.bf16.mxu0 0
      %539 = vmatpush1.bf16.msra.mxu0 %v501
      %540 = vmatprep.subr.bf16.mxu0 0
      %541 = vmatpush1.bf16.msra.mxu0 %v502
      %542 = vmatprep.subr.bf16.mxu0 0
      %543 = vmatpush1.bf16.msra.mxu0 %v503
      %544 = vmatprep.subr.bf16.mxu0 0
      %545 = vmatpush1.bf16.msra.mxu0 %v504
      %546 = vmatprep.subr.bf16.mxu0 0
      %547 = vmatpush1.bf16.msra.mxu0 %v505
      %548 = vmatprep.subr.bf16.mxu0 0
      %549 = vmatpush1.bf16.msra.mxu0 %v506
      %550 = vmatprep.subr.bf16.mxu0 0
      %551 = vmatpush1.bf16.msra.mxu0 %v507
      %552 = vmatprep.subr.bf16.mxu0 0
      %553 = vmatpush1.bf16.msra.mxu0 %v508
      %554 = vmatprep.subr.bf16.mxu0 0
      %555 = vmatpush1.bf16.msra.mxu0 %v509
      %556 = vmatprep.subr.bf16.mxu0 0
      %557 = vmatpush1.bf16.msra.mxu0 %v510
      %558 = vmatprep.subr.bf16.mxu0 0
      %559 = vmatpush1.bf16.msra.mxu0 %v511
      %560 = vmatprep.mubr.bf16.mxu0 %v401
      %561 = vmatmul.mubr.bf16.gmra.mrb[0].mxu0 %v400
      %v562 = vpop.f32.mrb[0].mxu0
      %v563 = vadd.f32 0.0, %v562
      %v564 = vpop.f32.mrb[0].mxu0
      %v565 = vpop.f32.mrb[0].mxu0
      %v566 = vadd.f32 0.0, %v565
      %v567 = vpop.f32.mrb[0].mxu0
      %568 = vmatprep.mubr.bf16.mxu0 %v403
      %569 = vmatmul.mubr.bf16.gmra.mrb[0].mxu0 %v402
      %v570 = vpop.f32.mrb[0].mxu0
      %v571 = vadd.f32 0.0, %v570
      %v572 = vpop.f32.mrb[0].mxu0
      %v573 = vpop.f32.mrb[0].mxu0
      %v574 = vadd.f32 0.0, %v573
      %v575 = vpop.f32.mrb[0].mxu0
      %576 = vmatprep.mubr.bf16.mxu0 %v405
      %577 = vmatmul.mubr.bf16.gmra.mrb[0].mxu0 %v404
      %v578 = vpop.f32.mrb[0].mxu0
      %v579 = vadd.f32 0.0, %v578
      %v580 = vpop.f32.mrb[0].mxu0
      %v581 = vpop.f32.mrb[0].mxu0
      %v582 = vadd.f32 0.0, %v581
      %v583 = vpop.f32.mrb[0].mxu0
      %584 = vmatprep.mubr.bf16.mxu0 %v407
      %585 = vmatmul.mubr.bf16.gmra.mrb[0].mxu0 %v406
      %v586 = vpop.f32.mrb[0].mxu0
      %v587 = vadd.f32 0.0, %v586
      %v588 = vpop.f32.mrb[0].mxu0
      %v589 = vpop.f32.mrb[0].mxu0
      %v590 = vadd.f32 0.0, %v589
      %v591 = vpop.f32.mrb[0].mxu0
      %592 = vmatprep.mubr.bf16.mxu0 %v409
      %593 = vmatmul.mubr.bf16.gmra.mrb[0].mxu0 %v408
      %v594 = vpop.f32.mrb[0].mxu0
      %v595 = vadd.f32 0.0, %v594
      %v596 = vpop.f32.mrb[0].mxu0
      %v597 = vpop.f32.mrb[0].mxu0
      %v598 = vadd.f32 0.0, %v597
      %v599 = vpop.f32.mrb[0].mxu0
      %600 = vmatprep.mubr.bf16.mxu0 %v411
      %601 = vmatmul.mubr.bf16.gmra.mrb[0].mxu0 %v410
      %v602 = vpop.f32.mrb[0].mxu0
      %v603 = vadd.f32 0.0, %v602
      %v604 = vpop.f32.mrb[0].mxu0
      %v605 = vpop.f32.mrb[0].mxu0
      %v606 = vadd.f32 0.0, %v605
      %v607 = vpop.f32.mrb[0].mxu0
      %608 = vmatprep.mubr.bf16.mxu0 %v413
      %609 = vmatmul.mubr.bf16.gmra.mrb[0].mxu0 %v412
      %v610 = vpop.f32.mrb[0].mxu0
      %v611 = vadd.f32 0.0, %v610
      %v612 = vpop.f32.mrb[0].mxu0
      %v613 = vpop.f32.mrb[0].mxu0
      %v614 = vadd.f32 0.0, %v613
      %v615 = vpop.f32.mrb[0].mxu0
      %616 = vmatprep.mubr.bf16.mxu0 %v415
      %617 = vmatmul.mubr.bf16.gmra.mrb[0].mxu0 %v414
      %v618 = vpop.f32.mrb[0].mxu0
      %v619 = vadd.f32 0.0, %v618
      %v620 = vpop.f32.mrb[0].mxu0
      %v621 = vpop.f32.mrb[0].mxu0
      %v622 = vadd.f32 0.0, %v621
      %v623 = vpop.f32.mrb[0].mxu0
      %624 = vdwg.mxu0
      %v625 = vadd.f32 %v288, %v563
      %v626 = vadd.f32 %v289, %v566
      %v627 = vadd.f32 %v290, %v571
      %v628 = vadd.f32 %v291, %v574
      %v629 = vadd.f32 %v292, %v579
      %v630 = vadd.f32 %v293, %v582
      %v631 = vadd.f32 %v294, %v587
      %v632 = vadd.f32 %v295, %v590
      %v633 = vadd.f32 %v296, %v595
      %v634 = vadd.f32 %v297, %v598
      %v635 = vadd.f32 %v298, %v603
      %v636 = vadd.f32 %v299, %v606
      %v637 = vadd.f32 %v300, %v611
      %v638 = vadd.f32 %v301, %v614
      %v639 = vadd.f32 %v302, %v619
      %v640 = vadd.f32 %v303, %v622
      %641 = vst [vmem:[#allocation2] sm:$0xff] %v625
      %642 = vst [vmem:[#allocation2 + $0x8] sm:$0xff] %v626
      %643 = vst [vmem:[#allocation2 + $0x10] sm:$0xff] %v627
      %644 = vst [vmem:[#allocation2 + $0x18] sm:$0xff] %v628
      %645 = vst [vmem:[#allocation2 + $0x20] sm:$0xff] %v629
      %646 = vst [vmem:[#allocation2 + $0x28] sm:$0xff] %v630
      %647 = vst [vmem:[#allocation2 + $0x30] sm:$0xff] %v631
      %648 = vst [vmem:[#allocation2 + $0x38] sm:$0xff] %v632
      %649 = vst [vmem:[#allocation2 + $0x40] sm:$0xff] %v633
      %650 = vst [vmem:[#allocation2 + $0x48] sm:$0xff] %v634
      %651 = vst [vmem:[#allocation2 + $0x50] sm:$0xff] %v635
      %652 = vst [vmem:[#allocation2 + $0x58] sm:$0xff] %v636
      %653 = vst [vmem:[#allocation2 + $0x60] sm:$0xff] %v637
      %654 = vst [vmem:[#allocation2 + $0x68] sm:$0xff] %v638
      %655 = vst [vmem:[#allocation2 + $0x70] sm:$0xff] %v639
      %656 = vst [vmem:[#allocation2 + $0x78] sm:$0xff] %v640
      // Predicated region
      $region37: #{pallas_matmul.1} parent=31 // pred_check
        %p657 = pneg %p268
      $region38: #{pallas_matmul.1} parent=31 // pred_check_branch
        %659 = sbr.rel (%p657) target = $region40
      $region39: #{pallas_matmul.1} parent=31 // pred_region
        %v660 = vld [vmem:[#allocation2] sm:$0xff]
        %v661 = vld [vmem:[#allocation2 + $0x8] sm:$0xff]
        %v662 = vld [vmem:[#allocation2 + $0x10] sm:$0xff]
        %v663 = vld [vmem:[#allocation2 + $0x18] sm:$0xff]
        %v664 = vld [vmem:[#allocation2 + $0x20] sm:$0xff]
        %v665 = vld [vmem:[#allocation2 + $0x28] sm:$0xff]
        %v666 = vld [vmem:[#allocation2 + $0x30] sm:$0xff]
        %v667 = vld [vmem:[#allocation2 + $0x38] sm:$0xff]
        %v668 = vld [vmem:[#allocation2 + $0x40] sm:$0xff]
        %v669 = vld [vmem:[#allocation2 + $0x48] sm:$0xff]
        %v670 = vld [vmem:[#allocation2 + $0x50] sm:$0xff]
        %v671 = vld [vmem:[#allocation2 + $0x58] sm:$0xff]
        %v672 = vld [vmem:[#allocation2 + $0x60] sm:$0xff]
        %v673 = vld [vmem:[#allocation2 + $0x68] sm:$0xff]
        %v674 = vld [vmem:[#allocation2 + $0x70] sm:$0xff]
        %v675 = vld [vmem:[#allocation2 + $0x78] sm:$0xff]
        %v676 = vld [vmem:[%s257] sm:$0x1]
        %v678 = vlaneseq
        %v679 = vshrl.u32 %v678, 7
        %v680 = vsub.s32 0, %v679
        %v681 = vrot.slane %v676, %v680
        %v683 = vadd.f32 %v660, %v681
        %v684 = vadd.f32 %v661, %v681
        %v685 = vadd.f32 %v662, %v681
        %v686 = vadd.f32 %v663, %v681
        %v687 = vadd.f32 %v664, %v681
        %v688 = vadd.f32 %v665, %v681
        %v689 = vadd.f32 %v666, %v681
        %v690 = vadd.f32 %v667, %v681
        %v691 = vadd.f32 %v668, %v681
        %v692 = vadd.f32 %v669, %v681
        %v693 = vadd.f32 %v670, %v681
        %v694 = vadd.f32 %v671, %v681
        %v695 = vadd.f32 %v672, %v681
        %v696 = vadd.f32 %v673, %v681
        %v697 = vadd.f32 %v674, %v681
        %v698 = vadd.f32 %v675, %v681
        %699 = vst [vmem:[%s265] sm:$0xff] %v683
        %700 = vst [vmem:[%s265 + $0x8] sm:$0xff] %v684
        %701 = vst [vmem:[%s265 + $0x10] sm:$0xff] %v685
        %702 = vst [vmem:[%s265 + $0x18] sm:$0xff] %v686
        %703 = vst [vmem:[%s265 + $0x20] sm:$0xff] %v687
        %704 = vst [vmem:[%s265 + $0x28] sm:$0xff] %v688
        %705 = vst [vmem:[%s265 + $0x30] sm:$0xff] %v689
        %706 = vst [vmem:[%s265 + $0x38] sm:$0xff] %v690
        %707 = vst [vmem:[%s265 + $0x40] sm:$0xff] %v691
        %708 = vst [vmem:[%s265 + $0x48] sm:$0xff] %v692
        %709 = vst [vmem:[%s265 + $0x50] sm:$0xff] %v693
        %710 = vst [vmem:[%s265 + $0x58] sm:$0xff] %v694
        %711 = vst [vmem:[%s265 + $0x60] sm:$0xff] %v695
        %712 = vst [vmem:[%s265 + $0x68] sm:$0xff] %v696
        %713 = vst [vmem:[%s265 + $0x70] sm:$0xff] %v697
        %714 = vst [vmem:[%s265 + $0x78] sm:$0xff] %v698
      $region40: #{pallas_matmul.1} parent=31 // pred_fallthru
        _
      %s715 = smul.u32 16, %s19
      %p716 = scmp.lt.s32.totalorder %s715, 127
      %s717 = scalar_select %p716, %s715, 127
      %p718 = scmp.lt.s32.totalorder %s20, 0
      %s719 = scalar_select %p718, %s20, 0
      %s720 = sadd.s32 %s719, %s717
      %s721 = smul.addr %s720, 8
      %s722 = scalar_lea.vmem %s3, %s721
      // Predicated region
      $region41: #{pallas_matmul.1} parent=31 // pred_check
        %p723 = pneg %p135
      $region42: #{pallas_matmul.1} parent=31 // pred_check_branch
        %725 = sbr.rel (%p723) target = $region44
      $region43: #{pallas_matmul.1} parent=31 // pred_region
        %s726 = smul.u32 16, %s19
      $region44: #{pallas_matmul.1} parent=31 // pred_fallthru
        _
    $region32: #{pallas_matmul.1} parent=5 // pred_fallthru
      _
    %p727 = scmp.le.s32.totalorder 2, %s9
    // Predicated region
    $region45: #{pallas_matmul.1} parent=5 // pred_check
      %p728 = pneg %p727
    $region46: #{pallas_matmul.1} parent=5 // pred_check_branch
      %730 = sbr.rel (%p728) target = $region48
    $region47: #{pallas_matmul.1} parent=5 // pred_region
      %s731 = ssub.s32 %s9, 2
      // Predicated region
      $region49: #{pallas_matmul.1} parent=47 // pred_check
        %p732 = pneg %p141
      $region50: #{pallas_matmul.1} parent=47 // pred_check_branch
        %734 = sbr.rel (%p732) target = $region52
      $region51: #{pallas_matmul.1} parent=47 // pred_region
        %s735 = smul.u32 16, %s22
        %p736 = scmp.lt.s32.totalorder %s735, 127
        %s737 = scalar_select %p736, %s735, 127
        %p738 = scmp.lt.s32.totalorder %s23, 0
        %s739 = scalar_select %p738, %s23, 0
        %s740 = sadd.s32 %s739, %s737
        %s741 = smul.addr %s740, 8
        %s742 = scalar_lea.vmem %s3, %s741
      $region52: #{pallas_matmul.1} parent=47 // pred_fallthru
        _
    $region48: #{pallas_matmul.1} parent=5 // pred_fallthru
      _
  $region6: #{pallas_matmul.1} parent=0 // loop_footer
    %s13 = sadd.s32 1, %s9
  $region7: #{pallas_matmul.1} parent=0 // loop_footer_branch
    %8 = sbr.rel target = $region3
  $region8: #{pallas_matmul.1} parent=0 // loop_exit
    _

</llo_original>
